<compile_context>
chip_gen: v5e
topology: v5e:2x2
jax: 0.10.0
libtpu: 0.0.40
codegen_flags: <defaults>
</compile_context>

<pallas_src>
import functools

import jax
import jax.numpy as jnp
from jax import lax
from jax.experimental import pallas as pl
from jax.experimental.pallas import tpu as pltpu


# --------------------------------------------------------------------------- kernels

def _cbr_bn_kernel(p_ref, w_ref, g_ref, bt_ref, o_ref, *,
                   M, Mpad, Cpad, tile_m, eps):
    """matmul -> training-mode batch-norm -> ReLU, chunked two-pass epilogue.

    p_ref  : (Mpad, Kdim)  bf16  im2col patches (zero rows beyond M)
    w_ref  : (Kdim, Cpad)  bf16  flattened conv weights, Cout padded to 128 lanes
    g_ref  : (1, Cpad)     f32   BN gamma (zero in padded lanes)
    bt_ref : (1, Cpad)     f32   BN beta  (zero in padded lanes)
    o_ref  : (Mpad, Cpad)  f32   output (lane-dense); also used as the f32 intermediate
    """
    w = w_ref[...]
    n_chunks = Mpad // tile_m

    # ---- pass 1: per-chunk matmul -> o_ref, accumulate per-channel sum / sumsq ----
    def pass1(c, carry):
        s, ss = carry
        r0 = pl.multiple_of(c * tile_m, tile_m)
        acc = jnp.dot(p_ref[pl.ds(r0, tile_m), :], w,
                      preferred_element_type=jnp.float32)          # (tile_m, Cpad) f32
        o_ref[pl.ds(r0, tile_m), :] = acc
        return (s + jnp.sum(acc, axis=0, keepdims=True),
                ss + jnp.sum(acc * acc, axis=0, keepdims=True))

    zero = jnp.zeros((1, Cpad), jnp.float32)
    s, ss = lax.fori_loop(0, n_chunks, pass1, (zero, zero), unroll=True)

    # Batch statistics over the M real rows (zero-padded rows contribute 0 to s/ss).
    inv_cnt = 1.0 / float(M)
    mean = s * inv_cnt
    # Single-pass E[x^2]-E[x]^2; conv bias is dropped so |mean| stays small. Guarded >= 0.
    var = jnp.maximum(ss * inv_cnt - mean * mean, 0.0)
    scale = g_ref[...] * lax.rsqrt(var + eps)          # padded lanes: gamma=0 -> scale=0
    shift = bt_ref[...] - mean * scale

    # ---- pass 2: per-chunk affine + ReLU, in place ----
    def pass2(c, _):
        r0 = pl.multiple_of(c * tile_m, tile_m)
        y = o_ref[pl.ds(r0, tile_m), :]
        o_ref[pl.ds(r0, tile_m), :] = jnp.maximum(y * scale + shift, 0.0)
        return 0

    lax.fori_loop(0, n_chunks, pass2, 0, unroll=True)


def _conv_bias_relu_kernel(p_ref, w_ref, b_ref, o_ref, *, Mpad, tile_m):
    """matmul -> bias -> ReLU (is_batchnorm=False path), single chunked pass."""
    w = w_ref[...]
    b = b_ref[...]

    def body(c, _):
        r0 = pl.multiple_of(c * tile_m, tile_m)
        acc = jnp.dot(p_ref[pl.ds(r0, tile_m), :], w,
                      preferred_element_type=jnp.float32)
        o_ref[pl.ds(r0, tile_m), :] = jnp.maximum(acc + b, 0.0)
        return 0

    lax.fori_loop(0, Mpad // tile_m, body, 0, unroll=True)


# --------------------------------------------------------------------------- wrapper

def conv2d_batchnorm_relu(x_nchw, weight_oihw, bias, gamma, beta, *,
                          stride=1, padding=1, dilation=1, eps=1e-5,
                          is_batchnorm=True, tile_m=128):
    N, Cin, Hin, Win = x_nchw.shape
    Cout, _, KH, KW = weight_oihw.shape

    LANES = 128
    Cpad = ((Cout + LANES - 1) // LANES) * LANES

    Hp, Wp = Hin + 2 * padding, Win + 2 * padding
    OH = (Hp - dilation * (KH - 1) - 1) // stride + 1
    OW = (Wp - dilation * (KW - 1) - 1) // stride + 1
    M = N * OH * OW
    Mpad = ((M + tile_m - 1) // tile_m) * tile_m
    Kdim = KH * KW * Cin

    # ---- wrapper-side im2col (cheap XLA slices; all layout work kept out of the kernel) ----
    # bf16 cast fused into the NCHW->NHWC transpose.
    x = jnp.transpose(x_nchw, (0, 2, 3, 1)).astype(jnp.bfloat16)
    xp = jnp.pad(x, ((0, 0), (padding, padding), (padding, padding), (0, 0)))
    pats = []
    for kh in range(KH):                               # minor-dim order: (kh, kw, cin)
        for kw in range(KW):
            h0, w0 = kh * dilation, kw * dilation
            pats.append(xp[:,
                           h0:h0 + stride * (OH - 1) + 1:stride,
                           w0:w0 + stride * (OW - 1) + 1:stride,
                           :])
    im2col = jnp.concatenate(pats, axis=-1).reshape(M, Kdim)
    if Mpad != M:
        im2col = jnp.pad(im2col, ((0, Mpad - M), (0, 0)))

    # OIHW -> (KH, KW, Cin, Cout) -> (Kdim, Cout), padded to Cpad lanes, bf16.
    w_flat = jnp.transpose(weight_oihw, (2, 3, 1, 0)).reshape(Kdim, Cout)
    w_flat = jnp.pad(w_flat, ((0, 0), (0, Cpad - Cout))).astype(jnp.bfloat16)

    def pad_c(v):
        return jnp.pad(v.astype(jnp.float32), (0, Cpad - Cout)).reshape(1, Cpad)

    row_spec = pl.BlockSpec((Mpad, Kdim), lambda i: (0, 0))
    w_spec = pl.BlockSpec((Kdim, Cpad), lambda i: (0, 0))
    vec_spec = pl.BlockSpec((1, Cpad), lambda i: (0, 0))
    out_spec = pl.BlockSpec((Mpad, Cpad), lambda i: (0, 0))

    if is_batchnorm:
        # Conv bias is a per-channel constant -> cancels exactly under batch-mean
        # subtraction; drop it (and its input stream) entirely.
        kernel = functools.partial(_cbr_bn_kernel, M=M, Mpad=Mpad, Cpad=Cpad,
                                   tile_m=tile_m, eps=eps)
        args = (im2col, w_flat, pad_c(gamma), pad_c(beta))
        in_specs = [row_spec, w_spec, vec_spec, vec_spec]
    else:
        kernel = functools.partial(_conv_bias_relu_kernel, Mpad=Mpad, tile_m=tile_m)
        args = (im2col, w_flat, pad_c(bias))
        in_specs = [row_spec, w_spec, vec_spec]

    out_flat = pl.pallas_call(
        kernel,
        out_shape=jax.ShapeDtypeStruct((Mpad, Cpad), jnp.float32),
        grid=(1,),
        in_specs=in_specs,
        out_specs=out_spec,
        compiler_params=pltpu.CompilerParams(
            dimension_semantics=("arbitrary",)),
    )(*args)

    # Drop padded rows / channels, back to NCHW in one slice + reshape + transpose.
    out = out_flat[:M, :Cout].reshape(N, OH, OW, Cout)
    return jnp.transpose(out, (0, 3, 1, 2))


# --------------------------------------------------------------------------- reference

def _reference(x_nchw, weight_oihw, bias, gamma, beta, *,
               stride, padding, dilation, eps, is_batchnorm=True):
    # Mirror the kernel's bf16 MXU inputs (f32 accumulation) so the comparison isolates
    # implementation differences rather than input-rounding differences.
    y = lax.conv_general_dilated(
        x_nchw.astype(jnp.bfloat16), weight_oihw.astype(jnp.bfloat16),
        window_strides=(stride, stride),
        padding=((padding, padding), (padding, padding)),
        rhs_dilation=(dilation, dilation),
        dimension_numbers=("NCHW", "OIHW", "NCHW"),
        preferred_element_type=jnp.float32)
    y = y + bias.reshape(1, -1, 1, 1).astype(jnp.float32)
    if is_batchnorm:
        mean = jnp.mean(y, axis=(0, 2, 3), keepdims=True)
        var = jnp.mean((y - mean) ** 2, axis=(0, 2, 3), keepdims=True)
        y = (y - mean) / jnp.sqrt(var + eps)
        y = y * gamma.reshape(1, -1, 1, 1) + beta.reshape(1, -1, 1, 1)
    return jnp.maximum(y, 0.0)


# --------------------------------------------------------------------------- test

if __name__ == "__main__":
    # conv2DBatchNormRelu(in_channels=4, out_channels=8, kernel_size=3, stride=1, padding=1)
    N, Cin, H, W = 2, 4, 16, 16
    Cout, K = 8, 3
    stride, padding, dilation, eps = 1, 1, 1, 1e-5

    key = jax.random.PRNGKey(0)
    kx, kw, kb = jax.random.split(key, 3)
    x = jax.random.normal(kx, (N, Cin, H, W), dtype=jnp.float32)
    weight = 0.1 * jax.random.normal(kw, (Cout, Cin, K, K), dtype=jnp.float32)
    bias = 0.1 * jax.random.normal(kb, (Cout,), dtype=jnp.float32)
    gamma = jnp.ones((Cout,), jnp.float32)   # PyTorch BatchNorm2d init
    beta = jnp.zeros((Cout,), jnp.float32)

    # --- BatchNorm path (module default) ---
    out = conv2d_batchnorm_relu(x, weight, bias, gamma, beta,
                                stride=stride, padding=padding,
                                dilation=dilation, eps=eps, is_batchnorm=True)
    out = jax.block_until_ready(out)
    ref = _reference(x, weight, bias, gamma, beta,
                     stride=stride, padding=padding, dilation=dilation,
                     eps=eps, is_batchnorm=True)
    assert out.shape == (N, Cout, H, W)
    assert jnp.allclose(out, ref, rtol=2e-3, atol=2e-3), \
        f"BN path max abs diff {float(jnp.max(jnp.abs(out - ref)))}"

    # --- no-BatchNorm path (conv + bias + ReLU) ---
    out_nb = conv2d_batchnorm_relu(x, weight, bias, gamma, beta,
                                   stride=stride, padding=padding,
                                   dilation=dilation, eps=eps, is_batchnorm=False)
    out_nb = jax.block_until_ready(out_nb)
    ref_nb = _reference(x, weight, bias, gamma, beta,
                        stride=stride, padding=padding, dilation=dilation,
                        eps=eps, is_batchnorm=False)
    assert out_nb.shape == (N, Cout, H, W)
    assert jnp.allclose(out_nb, ref_nb, rtol=2e-3, atol=2e-3), \
        f"no-BN path max abs diff {float(jnp.max(jnp.abs(out_nb - ref_nb)))}"

    print("KERNEL_OK")
</pallas_src>

<mosaic_0001>
module attributes {stable_mosaic.version = 11 : i64} {
  func.func @_cbr_bn_kernel(%arg0: i32, %arg1: memref<512x36xbf16, #tpu.memory_space<vmem>>, %arg2: memref<36x128xbf16, #tpu.memory_space<vmem>>, %arg3: memref<1x128xf32, #tpu.memory_space<vmem>>, %arg4: memref<1x128xf32, #tpu.memory_space<vmem>>, %arg5: memref<512x128xf32, #tpu.memory_space<vmem>>) attributes {dimension_semantics = [#tpu.dimension_semantics<arbitrary>], iteration_bounds = array<i64: 1>, scalar_prefetch = 0 : i64, scratch_operands = 0 : i64, tpu.core_type = #tpu.core_type<tc>, window_params = [{pipeline_mode = #tpu.pipeline_mode<synchronous>, transform_indices = @transform_0, window_bounds = array<i64: 512, 36>}, {pipeline_mode = #tpu.pipeline_mode<synchronous>, transform_indices = @transform_1, window_bounds = array<i64: 36, 128>}, {pipeline_mode = #tpu.pipeline_mode<synchronous>, transform_indices = @transform_2, window_bounds = array<i64: 1, 128>}, {pipeline_mode = #tpu.pipeline_mode<synchronous>, transform_indices = @transform_3, window_bounds = array<i64: 1, 128>}, {pipeline_mode = #tpu.pipeline_mode<synchronous>, transform_indices = @transform_4, window_bounds = array<i64: 512, 128>}]} {
    %c0 = arith.constant 0 : index
    %c0_0 = arith.constant 0 : index
    %0 = vector.load %arg2[%c0, %c0_0] : memref<36x128xbf16, #tpu.memory_space<vmem>>, vector<36x128xbf16>
    %cst = arith.constant 0.000000e+00 : f32
    %1 = vector.broadcast %cst : f32 to vector<1x128xf32>
    %c0_i32 = arith.constant 0 : i32
    %c128_i32 = arith.constant 128 : i32
    %2 = arith.muli %c0_i32, %c128_i32 : i32
    %3 = tpu.assume_multiple %2, 128 : i32
    %4 = arith.index_cast %3 : i32 to index
    %c0_1 = arith.constant 0 : index
    %5 = vector.load %arg1[%4, %c0_1] : memref<512x36xbf16, #tpu.memory_space<vmem>>, vector<128x36xbf16>
    %cst_2 = arith.constant dense<0.000000e+00> : vector<128x128xf32>
    %6 = tpu.matmul %5, %0, %cst_2 {dimension_numbers = #tpu.dot_dimension_numbers<[1], [0], [0], [1], [0, 0, 1, 1], [], []>} : vector<128x36xbf16>, vector<36x128xbf16>, vector<128x128xf32> -> vector<128x128xf32>
    %7 = arith.index_cast %3 : i32 to index
    %c0_3 = arith.constant 0 : index
    %8 = vector.load %arg5[%7, %c0_3] : memref<512x128xf32, #tpu.memory_space<vmem>>, vector<128x128xf32>
    tpu.vector_store %arg5[%7, %c0_3], %6 {strides = array<i32>} : memref<512x128xf32, #tpu.memory_space<vmem>>, vector<128x128xf32>,
    %cst_4 = arith.constant dense<0.000000e+00> : vector<128xf32>
    %9 = vector.multi_reduction <add>, %6, %cst_4 [0] : vector<128x128xf32> to vector<128xf32>
    %10 = vector.shape_cast %9 : vector<128xf32> to vector<1x128xf32>
    %11 = arith.addf %1, %10 : vector<1x128xf32>
    %12 = arith.mulf %6, %6 : vector<128x128xf32>
    %cst_5 = arith.constant dense<0.000000e+00> : vector<128xf32>
    %13 = vector.multi_reduction <add>, %12, %cst_5 [0] : vector<128x128xf32> to vector<128xf32>
    %14 = vector.shape_cast %13 : vector<128xf32> to vector<1x128xf32>
    %15 = arith.addf %1, %14 : vector<1x128xf32>
    %c1_i32 = arith.constant 1 : i32
    %c128_i32_6 = arith.constant 128 : i32
    %16 = arith.muli %c1_i32, %c128_i32_6 : i32
    %17 = tpu.assume_multiple %16, 128 : i32
    %18 = arith.index_cast %17 : i32 to index
    %c0_7 = arith.constant 0 : index
    %19 = vector.load %arg1[%18, %c0_7] : memref<512x36xbf16, #tpu.memory_space<vmem>>, vector<128x36xbf16>
    %cst_8 = arith.constant dense<0.000000e+00> : vector<128x128xf32>
    %20 = tpu.matmul %19, %0, %cst_8 {dimension_numbers = #tpu.dot_dimension_numbers<[1], [0], [0], [1], [0, 0, 1, 1], [], []>} : vector<128x36xbf16>, vector<36x128xbf16>, vector<128x128xf32> -> vector<128x128xf32>
    %21 = arith.index_cast %17 : i32 to index
    %c0_9 = arith.constant 0 : index
    %22 = vector.load %arg5[%21, %c0_9] : memref<512x128xf32, #tpu.memory_space<vmem>>, vector<128x128xf32>
    tpu.vector_store %arg5[%21, %c0_9], %20 {strides = array<i32>} : memref<512x128xf32, #tpu.memory_space<vmem>>, vector<128x128xf32>,
    %cst_10 = arith.constant dense<0.000000e+00> : vector<128xf32>
    %23 = vector.multi_reduction <add>, %20, %cst_10 [0] : vector<128x128xf32> to vector<128xf32>
    %24 = vector.shape_cast %23 : vector<128xf32> to vector<1x128xf32>
    %25 = arith.addf %11, %24 : vector<1x128xf32>
    %26 = arith.mulf %20, %20 : vector<128x128xf32>
    %cst_11 = arith.constant dense<0.000000e+00> : vector<128xf32>
    %27 = vector.multi_reduction <add>, %26, %cst_11 [0] : vector<128x128xf32> to vector<128xf32>
    %28 = vector.shape_cast %27 : vector<128xf32> to vector<1x128xf32>
    %29 = arith.addf %15, %28 : vector<1x128xf32>
    %c2_i32 = arith.constant 2 : i32
    %c128_i32_12 = arith.constant 128 : i32
    %30 = arith.muli %c2_i32, %c128_i32_12 : i32
    %31 = tpu.assume_multiple %30, 128 : i32
    %32 = arith.index_cast %31 : i32 to index
    %c0_13 = arith.constant 0 : index
    %33 = vector.load %arg1[%32, %c0_13] : memref<512x36xbf16, #tpu.memory_space<vmem>>, vector<128x36xbf16>
    %cst_14 = arith.constant dense<0.000000e+00> : vector<128x128xf32>
    %34 = tpu.matmul %33, %0, %cst_14 {dimension_numbers = #tpu.dot_dimension_numbers<[1], [0], [0], [1], [0, 0, 1, 1], [], []>} : vector<128x36xbf16>, vector<36x128xbf16>, vector<128x128xf32> -> vector<128x128xf32>
    %35 = arith.index_cast %31 : i32 to index
    %c0_15 = arith.constant 0 : index
    %36 = vector.load %arg5[%35, %c0_15] : memref<512x128xf32, #tpu.memory_space<vmem>>, vector<128x128xf32>
    tpu.vector_store %arg5[%35, %c0_15], %34 {strides = array<i32>} : memref<512x128xf32, #tpu.memory_space<vmem>>, vector<128x128xf32>,
    %cst_16 = arith.constant dense<0.000000e+00> : vector<128xf32>
    %37 = vector.multi_reduction <add>, %34, %cst_16 [0] : vector<128x128xf32> to vector<128xf32>
    %38 = vector.shape_cast %37 : vector<128xf32> to vector<1x128xf32>
    %39 = arith.addf %25, %38 : vector<1x128xf32>
    %40 = arith.mulf %34, %34 : vector<128x128xf32>
    %cst_17 = arith.constant dense<0.000000e+00> : vector<128xf32>
    %41 = vector.multi_reduction <add>, %40, %cst_17 [0] : vector<128x128xf32> to vector<128xf32>
    %42 = vector.shape_cast %41 : vector<128xf32> to vector<1x128xf32>
    %43 = arith.addf %29, %42 : vector<1x128xf32>
    %c3_i32 = arith.constant 3 : i32
    %c128_i32_18 = arith.constant 128 : i32
    %44 = arith.muli %c3_i32, %c128_i32_18 : i32
    %45 = tpu.assume_multiple %44, 128 : i32
    %46 = arith.index_cast %45 : i32 to index
    %c0_19 = arith.constant 0 : index
    %47 = vector.load %arg1[%46, %c0_19] : memref<512x36xbf16, #tpu.memory_space<vmem>>, vector<128x36xbf16>
    %cst_20 = arith.constant dense<0.000000e+00> : vector<128x128xf32>
    %48 = tpu.matmul %47, %0, %cst_20 {dimension_numbers = #tpu.dot_dimension_numbers<[1], [0], [0], [1], [0, 0, 1, 1], [], []>} : vector<128x36xbf16>, vector<36x128xbf16>, vector<128x128xf32> -> vector<128x128xf32>
    %49 = arith.index_cast %45 : i32 to index
    %c0_21 = arith.constant 0 : index
    %50 = vector.load %arg5[%49, %c0_21] : memref<512x128xf32, #tpu.memory_space<vmem>>, vector<128x128xf32>
    tpu.vector_store %arg5[%49, %c0_21], %48 {strides = array<i32>} : memref<512x128xf32, #tpu.memory_space<vmem>>, vector<128x128xf32>,
    %cst_22 = arith.constant dense<0.000000e+00> : vector<128xf32>
    %51 = vector.multi_reduction <add>, %48, %cst_22 [0] : vector<128x128xf32> to vector<128xf32>
    %52 = vector.shape_cast %51 : vector<128xf32> to vector<1x128xf32>
    %53 = arith.addf %39, %52 : vector<1x128xf32>
    %54 = arith.mulf %48, %48 : vector<128x128xf32>
    %cst_23 = arith.constant dense<0.000000e+00> : vector<128xf32>
    %55 = vector.multi_reduction <add>, %54, %cst_23 [0] : vector<128x128xf32> to vector<128xf32>
    %56 = vector.shape_cast %55 : vector<128xf32> to vector<1x128xf32>
    %57 = arith.addf %43, %56 : vector<1x128xf32>
    %c4_i32 = arith.constant 4 : i32
    %cst_24 = arith.constant 0.001953125 : f32
    %58 = vector.broadcast %cst_24 : f32 to vector<1x128xf32>
    %59 = arith.mulf %53, %58 : vector<1x128xf32>
    %cst_25 = arith.constant 0.001953125 : f32
    %60 = vector.broadcast %cst_25 : f32 to vector<1x128xf32>
    %61 = arith.mulf %57, %60 : vector<1x128xf32>
    %62 = arith.mulf %59, %59 : vector<1x128xf32>
    %63 = arith.subf %61, %62 : vector<1x128xf32>
    %cst_26 = arith.constant 0.000000e+00 : f32
    %64 = vector.broadcast %cst_26 : f32 to vector<1x128xf32>
    %65 = arith.maximumf %63, %64 : vector<1x128xf32>
    %c0_27 = arith.constant 0 : index
    %c0_28 = arith.constant 0 : index
    %66 = vector.load %arg3[%c0_27, %c0_28] : memref<1x128xf32, #tpu.memory_space<vmem>>, vector<1x128xf32>
    %cst_29 = arith.constant 9.99999974E-6 : f32
    %67 = vector.broadcast %cst_29 : f32 to vector<1x128xf32>
    %68 = arith.addf %65, %67 : vector<1x128xf32>
    %69 = math.rsqrt %68 : vector<1x128xf32>
    %70 = arith.mulf %66, %69 : vector<1x128xf32>
    %c0_30 = arith.constant 0 : index
    %c0_31 = arith.constant 0 : index
    %71 = vector.load %arg4[%c0_30, %c0_31] : memref<1x128xf32, #tpu.memory_space<vmem>>, vector<1x128xf32>
    %72 = arith.mulf %59, %70 : vector<1x128xf32>
    %73 = arith.subf %71, %72 : vector<1x128xf32>
    %c0_i32_32 = arith.constant 0 : i32
    %c128_i32_33 = arith.constant 128 : i32
    %74 = arith.muli %c0_i32_32, %c128_i32_33 : i32
    %75 = tpu.assume_multiple %74, 128 : i32
    %76 = arith.index_cast %75 : i32 to index
    %c0_34 = arith.constant 0 : index
    %77 = vector.load %arg5[%76, %c0_34] : memref<512x128xf32, #tpu.memory_space<vmem>>, vector<128x128xf32>
    %78 = vector.broadcast %70 : vector<1x128xf32> to vector<128x128xf32>
    %79 = arith.mulf %77, %78 : vector<128x128xf32>
    %80 = vector.broadcast %73 : vector<1x128xf32> to vector<128x128xf32>
    %81 = arith.addf %79, %80 : vector<128x128xf32>
    %cst_35 = arith.constant 0.000000e+00 : f32
    %82 = vector.broadcast %cst_35 : f32 to vector<128x128xf32>
    %83 = arith.maximumf %81, %82 : vector<128x128xf32>
    %84 = arith.index_cast %75 : i32 to index
    %c0_36 = arith.constant 0 : index
    %85 = vector.load %arg5[%84, %c0_36] : memref<512x128xf32, #tpu.memory_space<vmem>>, vector<128x128xf32>
    tpu.vector_store %arg5[%84, %c0_36], %83 {strides = array<i32>} : memref<512x128xf32, #tpu.memory_space<vmem>>, vector<128x128xf32>,
    %c1_i32_37 = arith.constant 1 : i32
    %c128_i32_38 = arith.constant 128 : i32
    %86 = arith.muli %c1_i32_37, %c128_i32_38 : i32
    %87 = tpu.assume_multiple %86, 128 : i32
    %88 = arith.index_cast %87 : i32 to index
    %c0_39 = arith.constant 0 : index
    %89 = vector.load %arg5[%88, %c0_39] : memref<512x128xf32, #tpu.memory_space<vmem>>, vector<128x128xf32>
    %90 = vector.broadcast %70 : vector<1x128xf32> to vector<128x128xf32>
    %91 = arith.mulf %89, %90 : vector<128x128xf32>
    %92 = vector.broadcast %73 : vector<1x128xf32> to vector<128x128xf32>
    %93 = arith.addf %91, %92 : vector<128x128xf32>
    %cst_40 = arith.constant 0.000000e+00 : f32
    %94 = vector.broadcast %cst_40 : f32 to vector<128x128xf32>
    %95 = arith.maximumf %93, %94 : vector<128x128xf32>
    %96 = arith.index_cast %87 : i32 to index
    %c0_41 = arith.constant 0 : index
    %97 = vector.load %arg5[%96, %c0_41] : memref<512x128xf32, #tpu.memory_space<vmem>>, vector<128x128xf32>
    tpu.vector_store %arg5[%96, %c0_41], %95 {strides = array<i32>} : memref<512x128xf32, #tpu.memory_space<vmem>>, vector<128x128xf32>,
    %c2_i32_42 = arith.constant 2 : i32
    %c128_i32_43 = arith.constant 128 : i32
    %98 = arith.muli %c2_i32_42, %c128_i32_43 : i32
    %99 = tpu.assume_multiple %98, 128 : i32
    %100 = arith.index_cast %99 : i32 to index
    %c0_44 = arith.constant 0 : index
    %101 = vector.load %arg5[%100, %c0_44] : memref<512x128xf32, #tpu.memory_space<vmem>>, vector<128x128xf32>
    %102 = vector.broadcast %70 : vector<1x128xf32> to vector<128x128xf32>
    %103 = arith.mulf %101, %102 : vector<128x128xf32>
    %104 = vector.broadcast %73 : vector<1x128xf32> to vector<128x128xf32>
    %105 = arith.addf %103, %104 : vector<128x128xf32>
    %cst_45 = arith.constant 0.000000e+00 : f32
    %106 = vector.broadcast %cst_45 : f32 to vector<128x128xf32>
    %107 = arith.maximumf %105, %106 : vector<128x128xf32>
    %108 = arith.index_cast %99 : i32 to index
    %c0_46 = arith.constant 0 : index
    %109 = vector.load %arg5[%108, %c0_46] : memref<512x128xf32, #tpu.memory_space<vmem>>, vector<128x128xf32>
    tpu.vector_store %arg5[%108, %c0_46], %107 {strides = array<i32>} : memref<512x128xf32, #tpu.memory_space<vmem>>, vector<128x128xf32>,
    %c3_i32_47 = arith.constant 3 : i32
    %c128_i32_48 = arith.constant 128 : i32
    %110 = arith.muli %c3_i32_47, %c128_i32_48 : i32
    %111 = tpu.assume_multiple %110, 128 : i32
    %112 = arith.index_cast %111 : i32 to index
    %c0_49 = arith.constant 0 : index
    %113 = vector.load %arg5[%112, %c0_49] : memref<512x128xf32, #tpu.memory_space<vmem>>, vector<128x128xf32>
    %114 = vector.broadcast %70 : vector<1x128xf32> to vector<128x128xf32>
    %115 = arith.mulf %113, %114 : vector<128x128xf32>
    %116 = vector.broadcast %73 : vector<1x128xf32> to vector<128x128xf32>
    %117 = arith.addf %115, %116 : vector<128x128xf32>
    %cst_50 = arith.constant 0.000000e+00 : f32
    %118 = vector.broadcast %cst_50 : f32 to vector<128x128xf32>
    %119 = arith.maximumf %117, %118 : vector<128x128xf32>
    %120 = arith.index_cast %111 : i32 to index
    %c0_51 = arith.constant 0 : index
    %121 = vector.load %arg5[%120, %c0_51] : memref<512x128xf32, #tpu.memory_space<vmem>>, vector<128x128xf32>
    tpu.vector_store %arg5[%120, %c0_51], %119 {strides = array<i32>} : memref<512x128xf32, #tpu.memory_space<vmem>>, vector<128x128xf32>,
    %c4_i32_52 = arith.constant 4 : i32
    return
  }
  func.func @transform_0(%arg0: i32) -> (i32, i32) {
    %c0_i32 = arith.constant 0 : i32
    %c0_i32_0 = arith.constant 0 : i32
    %c0_i32_1 = arith.constant 0 : i32
    return %c0_i32, %c0_i32_0 : i32, i32
  }
  func.func @transform_1(%arg0: i32) -> (i32, i32) {
    %c0_i32 = arith.constant 0 : i32
    %c0_i32_0 = arith.constant 0 : i32
    %c0_i32_1 = arith.constant 0 : i32
    return %c0_i32, %c0_i32_0 : i32, i32
  }
  func.func @transform_2(%arg0: i32) -> (i32, i32) {
    %c0_i32 = arith.constant 0 : i32
    %c0_i32_0 = arith.constant 0 : i32
    %c0_i32_1 = arith.constant 0 : i32
    return %c0_i32, %c0_i32_0 : i32, i32
  }
  func.func @transform_3(%arg0: i32) -> (i32, i32) {
    %c0_i32 = arith.constant 0 : i32
    %c0_i32_0 = arith.constant 0 : i32
    %c0_i32_1 = arith.constant 0 : i32
    return %c0_i32, %c0_i32_0 : i32, i32
  }
  func.func @transform_4(%arg0: i32) -> (i32, i32) {
    %c0_i32 = arith.constant 0 : i32
    %c0_i32_0 = arith.constant 0 : i32
    %c0_i32_1 = arith.constant 0 : i32
    return %c0_i32, %c0_i32_0 : i32, i32
  }
}

</mosaic_0001>

<llo_original>
// kernel: tpu_custom_call.1
$region0: #{tpu_custom_call.1}
  #allocation0 [shape = 'u32[]', space=smem, size = 0x4, offset = 0x4, fixed_abs, tag = 'smem constant byte address 0x4 - core index']
  #allocation1 [shape = 'u32[72,128]{1,0:T(1,128)}', space=vmem, size = 0x9000, scoped, tag = 'internal scratch']
  %s0 = inlined_call_operand.vmem [shape: bf16[512,36], index: 0, kind: input, shape index: {}]
  %s1 = inlined_call_operand.vmem [shape: bf16[36,128], index: 1, kind: input, shape index: {}]
  %s2 = inlined_call_operand.vmem [shape: f32[1,128], index: 2, kind: input, shape index: {}]
  %s3 = inlined_call_operand.vmem [shape: f32[1,128], index: 3, kind: input, shape index: {}]
  %s4 = inlined_call_operand.hbm [shape: f32[512,128], index: 4, kind: output, shape index: {}]
  %s5 = sld [smem:[#allocation0]]
  $region26: #{tpu_custom_call.1} parent=0
    _
  %s7 = ssub.s32 1, %s5
  %s8 = scalar_select 0, %s7, %s5
  $region1: #{tpu_custom_call.1} parent=0
    #allocation2 [shape = 'u8[262144]{0}', space=vmem, size = 0x40000, scoped, tag = 'output window, operand 0, single buffered']
    #allocation3 [shape = 's32[1]{0}', space=sflag, size = 0x4, scoped, tag = 'scoped memory for tpu_custom_call.1']
    %9 = vsyncpa [#allocation3], 0
    // Predicated region
    $region2: #{tpu_custom_call.1} parent=1 // pred_check
      _
    $region3: #{tpu_custom_call.1} parent=1 // pred_check_branch
      %11 = sbr.rel (0) target = $region5
    $region4: #{tpu_custom_call.1} parent=1 // pred_region
      _
    $region5: #{tpu_custom_call.1} parent=1 // pred_fallthru
      _
    // Predicated region
    $region6: #{tpu_custom_call.1} parent=1 // pred_check
      _
    $region7: #{tpu_custom_call.1} parent=1 // pred_check_branch
      %13 = sbr.rel (0) target = $region9
    $region8: #{tpu_custom_call.1} parent=1 // pred_region
      _
    $region9: #{tpu_custom_call.1} parent=1 // pred_fallthru
      _
    // Predicated region
    $region10: #{tpu_custom_call.1} parent=1 // pred_check
      _
    $region11: #{tpu_custom_call.1} parent=1 // pred_check_branch
      %15 = sbr.rel (0) target = $region13
    $region12: #{tpu_custom_call.1} parent=1 // pred_region
      _
    $region13: #{tpu_custom_call.1} parent=1 // pred_fallthru
      _
    // Predicated region
    $region14: #{tpu_custom_call.1} parent=1 // pred_check
      _
    $region15: #{tpu_custom_call.1} parent=1 // pred_check_branch
      %17 = sbr.rel (0) target = $region17
    $region16: #{tpu_custom_call.1} parent=1 // pred_region
      _
    $region17: #{tpu_custom_call.1} parent=1 // pred_fallthru
      _
    %v19 = vld [vmem:[%s1] sm:$0xf]
    %v20 = vld [vmem:[%s1 + $0x4] sm:$0xf]
    %v21 = vld [vmem:[%s1 + $0x8] sm:$0xf]
    %v22 = vld [vmem:[%s1 + $0xc] sm:$0xf]
    %v23 = vld [vmem:[%s1 + $0x10] sm:$0x3]
    %v24 = vld [vmem:[%s0] sm:$0xf]
    %v25 = vld [vmem:[%s0 + $0x4] sm:$0xf]
    %v26 = vld [vmem:[%s0 + $0x8] sm:$0xf]
    %v27 = vld [vmem:[%s0 + $0xc] sm:$0xf]
    %v28 = vld [vmem:[%s0 + $0x10] sm:$0xf]
    %v29 = vld [vmem:[%s0 + $0x14] sm:$0xf]
    %v30 = vld [vmem:[%s0 + $0x18] sm:$0xf]
    %v31 = vld [vmem:[%s0 + $0x1c] sm:$0xf]
    %v32 = vld [vmem:[%s0 + $0x20] sm:$0xf]
    %v33 = vld [vmem:[%s0 + $0x24] sm:$0xf]
    %v34 = vld [vmem:[%s0 + $0x28] sm:$0xf]
    %v35 = vld [vmem:[%s0 + $0x2c] sm:$0xf]
    %v36 = vld [vmem:[%s0 + $0x30] sm:$0xf]
    %v37 = vld [vmem:[%s0 + $0x34] sm:$0xf]
    %v38 = vld [vmem:[%s0 + $0x38] sm:$0xf]
    %v39 = vld [vmem:[%s0 + $0x3c] sm:$0xf]
    %v56 = vunpack.c.l.b16 %v24
    %v57 = vunpack.c.l.b16 %v25
    %v58 = vunpack.c.l.b16 %v26
    %v59 = vunpack.c.l.b16 %v27
    %v60 = vunpack.c.l.b16 %v28
    %v61 = vunpack.c.l.b16 %v29
    %v62 = vunpack.c.l.b16 %v30
    %v63 = vunpack.c.l.b16 %v31
    %v64 = vunpack.c.l.b16 %v32
    %v65 = vunpack.c.l.b16 %v33
    %v66 = vunpack.c.l.b16 %v34
    %v67 = vunpack.c.l.b16 %v35
    %v68 = vunpack.c.l.b16 %v36
    %v69 = vunpack.c.l.b16 %v37
    %v70 = vunpack.c.l.b16 %v38
    %v71 = vunpack.c.l.b16 %v39
    %v72 = vpack.c.b16 %v57, %v56
    %v73 = vpack.c.b16 %v59, %v58
    %v74 = vpack.c.b16 %v61, %v60
    %v75 = vpack.c.b16 %v63, %v62
    %v76 = vpack.c.b16 %v65, %v64
    %v77 = vpack.c.b16 %v67, %v66
    %v78 = vpack.c.b16 %v69, %v68
    %v79 = vpack.c.b16 %v71, %v70
    %v85 = vunpack.c.l.b16 %v19
    %v86 = vunpack.c.l.b16 %v20
    %v87 = vunpack.c.l.b16 %v21
    %v88 = vunpack.c.l.b16 %v22
    %v89 = vunpack.c.l.b16 %v23
    %v90 = vpack.c.b16 %v86, %v85
    %v91 = vpack.c.b16 %v88, %v87
    %v92 = vpack.c.b16 %v89, %v89
    %vm95 = vcmask 293888
    %v97 = vsel %vm95, %v72, 0
    %v100 = vsel %vm95, %v73, 0
    %v103 = vsel %vm95, %v74, 0
    %v106 = vsel %vm95, %v75, 0
    %v109 = vsel %vm95, %v76, 0
    %v112 = vsel %vm95, %v77, 0
    %v115 = vsel %vm95, %v78, 0
    %v118 = vsel %vm95, %v79, 0
    %vm120 = vcmask 1041408
    %v122 = vsel %vm120, %v92, 0
    %124 = vmatpush.bf16.msra.mxu0 0
    %125 = vmatpush.bf16.msra.mxu0 0
    %126 = vmatpush.bf16.msra.mxu0 0
    %127 = vmatpush.bf16.msra.mxu0 0
    %128 = vmatpush.bf16.msra.mxu0 0
    %129 = vmatpush.bf16.msra.mxu0 %v122
    %130 = vmatpush.bf16.msra.mxu0 %v91
    %131 = vmatpush.bf16.msra.mxu0 %v90
    %132 = vmatmul.bf16.gmra.mxu0 %v97
    %v133 = vpop.f32.mrf.mxu0
    %v134 = vadd.f32 0.0, %v133
    %v135 = vpop.f32.mrf.mxu0
    %v136 = vadd.f32 0.0, %v135
    %137 = vmatmul.bf16.gmra.mxu0 %v100
    %v138 = vpop.f32.mrf.mxu0
    %v139 = vadd.f32 0.0, %v138
    %v140 = vpop.f32.mrf.mxu0
    %v141 = vadd.f32 0.0, %v140
    %142 = vmatmul.bf16.gmra.mxu0 %v103
    %v143 = vpop.f32.mrf.mxu0
    %v144 = vadd.f32 0.0, %v143
    %v145 = vpop.f32.mrf.mxu0
    %v146 = vadd.f32 0.0, %v145
    %147 = vmatmul.bf16.gmra.mxu0 %v106
    %v148 = vpop.f32.mrf.mxu0
    %v149 = vadd.f32 0.0, %v148
    %v150 = vpop.f32.mrf.mxu0
    %v151 = vadd.f32 0.0, %v150
    %152 = vmatmul.bf16.gmra.mxu0 %v109
    %v153 = vpop.f32.mrf.mxu0
    %v154 = vadd.f32 0.0, %v153
    %v155 = vpop.f32.mrf.mxu0
    %v156 = vadd.f32 0.0, %v155
    %157 = vmatmul.bf16.gmra.mxu0 %v112
    %v158 = vpop.f32.mrf.mxu0
    %v159 = vadd.f32 0.0, %v158
    %v160 = vpop.f32.mrf.mxu0
    %v161 = vadd.f32 0.0, %v160
    %162 = vmatmul.bf16.gmra.mxu0 %v115
    %v163 = vpop.f32.mrf.mxu0
    %v164 = vadd.f32 0.0, %v163
    %v165 = vpop.f32.mrf.mxu0
    %v166 = vadd.f32 0.0, %v165
    %167 = vmatmul.bf16.gmra.mxu0 %v118
    %v168 = vpop.f32.mrf.mxu0
    %v169 = vadd.f32 0.0, %v168
    %v170 = vpop.f32.mrf.mxu0
    %v171 = vadd.f32 0.0, %v170
    %172 = vdwg.mxu0
    %173 = vst [vmem:[#allocation2] sm:$0xff] %v134
    %174 = vst [vmem:[#allocation2 + $0x8] sm:$0xff] %v136
    %175 = vst [vmem:[#allocation2 + $0x10] sm:$0xff] %v139
    %176 = vst [vmem:[#allocation2 + $0x18] sm:$0xff] %v141
    %177 = vst [vmem:[#allocation2 + $0x20] sm:$0xff] %v144
    %178 = vst [vmem:[#allocation2 + $0x28] sm:$0xff] %v146
    %179 = vst [vmem:[#allocation2 + $0x30] sm:$0xff] %v149
    %180 = vst [vmem:[#allocation2 + $0x38] sm:$0xff] %v151
    %181 = vst [vmem:[#allocation2 + $0x40] sm:$0xff] %v154
    %182 = vst [vmem:[#allocation2 + $0x48] sm:$0xff] %v156
    %183 = vst [vmem:[#allocation2 + $0x50] sm:$0xff] %v159
    %184 = vst [vmem:[#allocation2 + $0x58] sm:$0xff] %v161
    %185 = vst [vmem:[#allocation2 + $0x60] sm:$0xff] %v164
    %186 = vst [vmem:[#allocation2 + $0x68] sm:$0xff] %v166
    %187 = vst [vmem:[#allocation2 + $0x70] sm:$0xff] %v169
    %188 = vst [vmem:[#allocation2 + $0x78] sm:$0xff] %v171
    %v189 = vadd.f32 %v134, %v136
    %v190 = vadd.f32 %v189, %v139
    %v191 = vadd.f32 %v190, %v141
    %v192 = vadd.f32 %v191, %v144
    %v193 = vadd.f32 %v192, %v146
    %v194 = vadd.f32 %v193, %v149
    %v195 = vadd.f32 %v194, %v151
    %v196 = vadd.f32 %v195, %v154
    %v197 = vadd.f32 %v196, %v156
    %v198 = vadd.f32 %v197, %v159
    %v199 = vadd.f32 %v198, %v161
    %v200 = vadd.f32 %v199, %v164
    %v201 = vadd.f32 %v200, %v166
    %v202 = vadd.f32 %v201, %v169
    %v203 = vadd.f32 %v202, %v171
    %v204 = vrot.slane %v203, 4
    %v205 = vadd.f32 %v203, %v204
    %v206 = vrot.slane %v205, 2
    %v207 = vadd.f32 %v205, %v206
    %v208 = vrot.slane %v207, 1
    %v209 = vadd.f32 %v207, %v208
    %v210 = vadd.f32 %v209, 0.0
    %v211 = vmul.f32 %v134, %v134
    %v212 = vmul.f32 %v136, %v136
    %v213 = vmul.f32 %v139, %v139
    %v214 = vmul.f32 %v141, %v141
    %v215 = vmul.f32 %v144, %v144
    %v216 = vmul.f32 %v146, %v146
    %v217 = vmul.f32 %v149, %v149
    %v218 = vmul.f32 %v151, %v151
    %v219 = vmul.f32 %v154, %v154
    %v220 = vmul.f32 %v156, %v156
    %v221 = vmul.f32 %v159, %v159
    %v222 = vmul.f32 %v161, %v161
    %v223 = vmul.f32 %v164, %v164
    %v224 = vmul.f32 %v166, %v166
    %v225 = vmul.f32 %v169, %v169
    %v226 = vmul.f32 %v171, %v171
    %v227 = vadd.f32 %v211, %v212
    %v228 = vadd.f32 %v227, %v213
    %v229 = vadd.f32 %v228, %v214
    %v230 = vadd.f32 %v229, %v215
    %v231 = vadd.f32 %v230, %v216
    %v232 = vadd.f32 %v231, %v217
    %v233 = vadd.f32 %v232, %v218
    %v234 = vadd.f32 %v233, %v219
    %v235 = vadd.f32 %v234, %v220
    %v236 = vadd.f32 %v235, %v221
    %v237 = vadd.f32 %v236, %v222
    %v238 = vadd.f32 %v237, %v223
    %v239 = vadd.f32 %v238, %v224
    %v240 = vadd.f32 %v239, %v225
    %v241 = vadd.f32 %v240, %v226
    %v242 = vrot.slane %v241, 4
    %v243 = vadd.f32 %v241, %v242
    %v244 = vrot.slane %v243, 2
    %v245 = vadd.f32 %v243, %v244
    %v246 = vrot.slane %v245, 1
    %v247 = vadd.f32 %v245, %v246
    %v248 = vadd.f32 %v247, 0.0
    %s249 = scalar_lea.vmem %s0, 64
    %v250 = vld [vmem:[%s249] sm:$0xf]
    %v251 = vld [vmem:[%s249 + $0x4] sm:$0xf]
    %v252 = vld [vmem:[%s249 + $0x8] sm:$0xf]
    %v253 = vld [vmem:[%s249 + $0xc] sm:$0xf]
    %v254 = vld [vmem:[%s249 + $0x10] sm:$0xf]
    %v255 = vld [vmem:[%s249 + $0x14] sm:$0xf]
    %v256 = vld [vmem:[%s249 + $0x18] sm:$0xf]
    %v257 = vld [vmem:[%s249 + $0x1c] sm:$0xf]
    %v258 = vld [vmem:[%s249 + $0x20] sm:$0xf]
    %v259 = vld [vmem:[%s249 + $0x24] sm:$0xf]
    %v260 = vld [vmem:[%s249 + $0x28] sm:$0xf]
    %v261 = vld [vmem:[%s249 + $0x2c] sm:$0xf]
    %v262 = vld [vmem:[%s249 + $0x30] sm:$0xf]
    %v263 = vld [vmem:[%s249 + $0x34] sm:$0xf]
    %v264 = vld [vmem:[%s249 + $0x38] sm:$0xf]
    %v265 = vld [vmem:[%s249 + $0x3c] sm:$0xf]
    %v282 = vunpack.c.l.b16 %v250
    %v283 = vunpack.c.l.b16 %v251
    %v284 = vunpack.c.l.b16 %v252
    %v285 = vunpack.c.l.b16 %v253
    %v286 = vunpack.c.l.b16 %v254
    %v287 = vunpack.c.l.b16 %v255
    %v288 = vunpack.c.l.b16 %v256
    %v289 = vunpack.c.l.b16 %v257
    %v290 = vunpack.c.l.b16 %v258
    %v291 = vunpack.c.l.b16 %v259
    %v292 = vunpack.c.l.b16 %v260
    %v293 = vunpack.c.l.b16 %v261
    %v294 = vunpack.c.l.b16 %v262
    %v295 = vunpack.c.l.b16 %v263
    %v296 = vunpack.c.l.b16 %v264
    %v297 = vunpack.c.l.b16 %v265
    %v298 = vpack.c.b16 %v283, %v282
    %v299 = vpack.c.b16 %v285, %v284
    %v300 = vpack.c.b16 %v287, %v286
    %v301 = vpack.c.b16 %v289, %v288
    %v302 = vpack.c.b16 %v291, %v290
    %v303 = vpack.c.b16 %v293, %v292
    %v304 = vpack.c.b16 %v295, %v294
    %v305 = vpack.c.b16 %v297, %v296
    %v307 = vsel %vm95, %v298, 0
    %v310 = vsel %vm95, %v299, 0
    %v313 = vsel %vm95, %v300, 0
    %v316 = vsel %vm95, %v301, 0
    %v319 = vsel %vm95, %v302, 0
    %v322 = vsel %vm95, %v303, 0
    %v325 = vsel %vm95, %v304, 0
    %v328 = vsel %vm95, %v305, 0
    %330 = vmatpush.bf16.msra.mxu0 0
    %331 = vmatpush.bf16.msra.mxu0 0
    %332 = vmatpush.bf16.msra.mxu0 0
    %333 = vmatpush.bf16.msra.mxu0 0
    %334 = vmatpush.bf16.msra.mxu0 0
    %335 = vmatpush.bf16.msra.mxu0 %v122
    %336 = vmatpush.bf16.msra.mxu0 %v91
    %337 = vmatpush.bf16.msra.mxu0 %v90
    %338 = vmatmul.bf16.gmra.mxu0 %v307
    %v339 = vpop.f32.mrf.mxu0
    %v340 = vadd.f32 0.0, %v339
    %v341 = vpop.f32.mrf.mxu0
    %v342 = vadd.f32 0.0, %v341
    %343 = vmatmul.bf16.gmra.mxu0 %v310
    %v344 = vpop.f32.mrf.mxu0
    %v345 = vadd.f32 0.0, %v344
    %v346 = vpop.f32.mrf.mxu0
    %v347 = vadd.f32 0.0, %v346
    %348 = vmatmul.bf16.gmra.mxu0 %v313
    %v349 = vpop.f32.mrf.mxu0
    %v350 = vadd.f32 0.0, %v349
    %v351 = vpop.f32.mrf.mxu0
    %v352 = vadd.f32 0.0, %v351
    %353 = vmatmul.bf16.gmra.mxu0 %v316
    %v354 = vpop.f32.mrf.mxu0
    %v355 = vadd.f32 0.0, %v354
    %v356 = vpop.f32.mrf.mxu0
    %v357 = vadd.f32 0.0, %v356
    %358 = vmatmul.bf16.gmra.mxu0 %v319
    %v359 = vpop.f32.mrf.mxu0
    %v360 = vadd.f32 0.0, %v359
    %v361 = vpop.f32.mrf.mxu0
    %v362 = vadd.f32 0.0, %v361
    %363 = vmatmul.bf16.gmra.mxu0 %v322
    %v364 = vpop.f32.mrf.mxu0
    %v365 = vadd.f32 0.0, %v364
    %v366 = vpop.f32.mrf.mxu0
    %v367 = vadd.f32 0.0, %v366
    %368 = vmatmul.bf16.gmra.mxu0 %v325
    %v369 = vpop.f32.mrf.mxu0
    %v370 = vadd.f32 0.0, %v369
    %v371 = vpop.f32.mrf.mxu0
    %v372 = vadd.f32 0.0, %v371
    %373 = vmatmul.bf16.gmra.mxu0 %v328
    %v374 = vpop.f32.mrf.mxu0
    %v375 = vadd.f32 0.0, %v374
    %v376 = vpop.f32.mrf.mxu0
    %v377 = vadd.f32 0.0, %v376
    %378 = vdwg.mxu0
    %s379 = scalar_lea.vmem [#allocation2], 128
    %380 = vst [vmem:[%s379] sm:$0xff] %v340
    %381 = vst [vmem:[%s379 + $0x8] sm:$0xff] %v342
    %382 = vst [vmem:[%s379 + $0x10] sm:$0xff] %v345
    %383 = vst [vmem:[%s379 + $0x18] sm:$0xff] %v347
    %384 = vst [vmem:[%s379 + $0x20] sm:$0xff] %v350
    %385 = vst [vmem:[%s379 + $0x28] sm:$0xff] %v352
    %386 = vst [vmem:[%s379 + $0x30] sm:$0xff] %v355
    %387 = vst [vmem:[%s379 + $0x38] sm:$0xff] %v357
    %388 = vst [vmem:[%s379 + $0x40] sm:$0xff] %v360
    %389 = vst [vmem:[%s379 + $0x48] sm:$0xff] %v362
    %390 = vst [vmem:[%s379 + $0x50] sm:$0xff] %v365
    %391 = vst [vmem:[%s379 + $0x58] sm:$0xff] %v367
    %392 = vst [vmem:[%s379 + $0x60] sm:$0xff] %v370
    %393 = vst [vmem:[%s379 + $0x68] sm:$0xff] %v372
    %394 = vst [vmem:[%s379 + $0x70] sm:$0xff] %v375
    %395 = vst [vmem:[%s379 + $0x78] sm:$0xff] %v377
    %v396 = vadd.f32 %v340, %v342
    %v397 = vadd.f32 %v396, %v345
    %v398 = vadd.f32 %v397, %v347
    %v399 = vadd.f32 %v398, %v350
    %v400 = vadd.f32 %v399, %v352
    %v401 = vadd.f32 %v400, %v355
    %v402 = vadd.f32 %v401, %v357
    %v403 = vadd.f32 %v402, %v360
    %v404 = vadd.f32 %v403, %v362
    %v405 = vadd.f32 %v404, %v365
    %v406 = vadd.f32 %v405, %v367
    %v407 = vadd.f32 %v406, %v370
    %v408 = vadd.f32 %v407, %v372
    %v409 = vadd.f32 %v408, %v375
    %v410 = vadd.f32 %v409, %v377
    %v411 = vrot.slane %v410, 4
    %v412 = vadd.f32 %v410, %v411
    %v413 = vrot.slane %v412, 2
    %v414 = vadd.f32 %v412, %v413
    %v415 = vrot.slane %v414, 1
    %v416 = vadd.f32 %v414, %v415
    %v417 = vadd.f32 %v210, %v416
    %v418 = vmul.f32 %v340, %v340
    %v419 = vmul.f32 %v342, %v342
    %v420 = vmul.f32 %v345, %v345
    %v421 = vmul.f32 %v347, %v347
    %v422 = vmul.f32 %v350, %v350
    %v423 = vmul.f32 %v352, %v352
    %v424 = vmul.f32 %v355, %v355
    %v425 = vmul.f32 %v357, %v357
    %v426 = vmul.f32 %v360, %v360
    %v427 = vmul.f32 %v362, %v362
    %v428 = vmul.f32 %v365, %v365
    %v429 = vmul.f32 %v367, %v367
    %v430 = vmul.f32 %v370, %v370
    %v431 = vmul.f32 %v372, %v372
    %v432 = vmul.f32 %v375, %v375
    %v433 = vmul.f32 %v377, %v377
    %v434 = vadd.f32 %v418, %v419
    %v435 = vadd.f32 %v434, %v420
    %v436 = vadd.f32 %v435, %v421
    %v437 = vadd.f32 %v436, %v422
    %v438 = vadd.f32 %v437, %v423
    %v439 = vadd.f32 %v438, %v424
    %v440 = vadd.f32 %v439, %v425
    %v441 = vadd.f32 %v440, %v426
    %v442 = vadd.f32 %v441, %v427
    %v443 = vadd.f32 %v442, %v428
    %v444 = vadd.f32 %v443, %v429
    %v445 = vadd.f32 %v444, %v430
    %v446 = vadd.f32 %v445, %v431
    %v447 = vadd.f32 %v446, %v432
    %v448 = vadd.f32 %v447, %v433
    %v449 = vrot.slane %v448, 4
    %v450 = vadd.f32 %v448, %v449
    %v451 = vrot.slane %v450, 2
    %v452 = vadd.f32 %v450, %v451
    %v453 = vrot.slane %v452, 1
    %v454 = vadd.f32 %v452, %v453
    %v455 = vadd.f32 %v248, %v454
    %s456 = scalar_lea.vmem %s0, 128
    %v457 = vld [vmem:[%s456] sm:$0xf]
    %v458 = vld [vmem:[%s456 + $0x4] sm:$0xf]
    %v459 = vld [vmem:[%s456 + $0x8] sm:$0xf]
    %v460 = vld [vmem:[%s456 + $0xc] sm:$0xf]
    %v461 = vld [vmem:[%s456 + $0x10] sm:$0xf]
    %v462 = vld [vmem:[%s456 + $0x14] sm:$0xf]
    %v463 = vld [vmem:[%s456 + $0x18] sm:$0xf]
    %v464 = vld [vmem:[%s456 + $0x1c] sm:$0xf]
    %v465 = vld [vmem:[%s456 + $0x20] sm:$0xf]
    %v466 = vld [vmem:[%s456 + $0x24] sm:$0xf]
    %v467 = vld [vmem:[%s456 + $0x28] sm:$0xf]
    %v468 = vld [vmem:[%s456 + $0x2c] sm:$0xf]
    %v469 = vld [vmem:[%s456 + $0x30] sm:$0xf]
    %v470 = vld [vmem:[%s456 + $0x34] sm:$0xf]
    %v471 = vld [vmem:[%s456 + $0x38] sm:$0xf]
    %v472 = vld [vmem:[%s456 + $0x3c] sm:$0xf]
    %v489 = vunpack.c.l.b16 %v457
    %v490 = vunpack.c.l.b16 %v458
    %v491 = vunpack.c.l.b16 %v459
    %v492 = vunpack.c.l.b16 %v460
    %v493 = vunpack.c.l.b16 %v461
    %v494 = vunpack.c.l.b16 %v462
    %v495 = vunpack.c.l.b16 %v463
    %v496 = vunpack.c.l.b16 %v464
    %v497 = vunpack.c.l.b16 %v465
    %v498 = vunpack.c.l.b16 %v466
    %v499 = vunpack.c.l.b16 %v467
    %v500 = vunpack.c.l.b16 %v468
    %v501 = vunpack.c.l.b16 %v469
    %v502 = vunpack.c.l.b16 %v470
    %v503 = vunpack.c.l.b16 %v471
    %v504 = vunpack.c.l.b16 %v472
    %v505 = vpack.c.b16 %v490, %v489
    %v506 = vpack.c.b16 %v492, %v491
    %v507 = vpack.c.b16 %v494, %v493
    %v508 = vpack.c.b16 %v496, %v495
    %v509 = vpack.c.b16 %v498, %v497
    %v510 = vpack.c.b16 %v500, %v499
    %v511 = vpack.c.b16 %v502, %v501
    %v512 = vpack.c.b16 %v504, %v503
    %v514 = vsel %vm95, %v505, 0
    %v517 = vsel %vm95, %v506, 0
    %v520 = vsel %vm95, %v507, 0
    %v523 = vsel %vm95, %v508, 0
    %v526 = vsel %vm95, %v509, 0
    %v529 = vsel %vm95, %v510, 0
    %v532 = vsel %vm95, %v511, 0
    %v535 = vsel %vm95, %v512, 0
    %537 = vmatpush.bf16.msra.mxu0 0
    %538 = vmatpush.bf16.msra.mxu0 0
    %539 = vmatpush.bf16.msra.mxu0 0
    %540 = vmatpush.bf16.msra.mxu0 0
    %541 = vmatpush.bf16.msra.mxu0 0
    %542 = vmatpush.bf16.msra.mxu0 %v122
    %543 = vmatpush.bf16.msra.mxu0 %v91
    %544 = vmatpush.bf16.msra.mxu0 %v90
    %545 = vmatmul.bf16.gmra.mxu0 %v514
    %v546 = vpop.f32.mrf.mxu0
    %v547 = vadd.f32 0.0, %v546
    %v548 = vpop.f32.mrf.mxu0
    %v549 = vadd.f32 0.0, %v548
    %550 = vmatmul.bf16.gmra.mxu0 %v517
    %v551 = vpop.f32.mrf.mxu0
    %v552 = vadd.f32 0.0, %v551
    %v553 = vpop.f32.mrf.mxu0
    %v554 = vadd.f32 0.0, %v553
    %555 = vmatmul.bf16.gmra.mxu0 %v520
    %v556 = vpop.f32.mrf.mxu0
    %v557 = vadd.f32 0.0, %v556
    %v558 = vpop.f32.mrf.mxu0
    %v559 = vadd.f32 0.0, %v558
    %560 = vmatmul.bf16.gmra.mxu0 %v523
    %v561 = vpop.f32.mrf.mxu0
    %v562 = vadd.f32 0.0, %v561
    %v563 = vpop.f32.mrf.mxu0
    %v564 = vadd.f32 0.0, %v563
    %565 = vmatmul.bf16.gmra.mxu0 %v526
    %v566 = vpop.f32.mrf.mxu0
    %v567 = vadd.f32 0.0, %v566
    %v568 = vpop.f32.mrf.mxu0
    %v569 = vadd.f32 0.0, %v568
    %570 = vmatmul.bf16.gmra.mxu0 %v529
    %v571 = vpop.f32.mrf.mxu0
    %v572 = vadd.f32 0.0, %v571
    %v573 = vpop.f32.mrf.mxu0
    %v574 = vadd.f32 0.0, %v573
    %575 = vmatmul.bf16.gmra.mxu0 %v532
    %v576 = vpop.f32.mrf.mxu0
    %v577 = vadd.f32 0.0, %v576
    %v578 = vpop.f32.mrf.mxu0
    %v579 = vadd.f32 0.0, %v578
    %580 = vmatmul.bf16.gmra.mxu0 %v535
    %v581 = vpop.f32.mrf.mxu0
    %v582 = vadd.f32 0.0, %v581
    %v583 = vpop.f32.mrf.mxu0
    %v584 = vadd.f32 0.0, %v583
    %585 = vdwg.mxu0
    %s586 = scalar_lea.vmem [#allocation2], 256
    %587 = vst [vmem:[%s586] sm:$0xff] %v547
    %588 = vst [vmem:[%s586 + $0x8] sm:$0xff] %v549
    %589 = vst [vmem:[%s586 + $0x10] sm:$0xff] %v552
    %590 = vst [vmem:[%s586 + $0x18] sm:$0xff] %v554
    %591 = vst [vmem:[%s586 + $0x20] sm:$0xff] %v557
    %592 = vst [vmem:[%s586 + $0x28] sm:$0xff] %v559
    %593 = vst [vmem:[%s586 + $0x30] sm:$0xff] %v562
    %594 = vst [vmem:[%s586 + $0x38] sm:$0xff] %v564
    %595 = vst [vmem:[%s586 + $0x40] sm:$0xff] %v567
    %596 = vst [vmem:[%s586 + $0x48] sm:$0xff] %v569
    %597 = vst [vmem:[%s586 + $0x50] sm:$0xff] %v572
    %598 = vst [vmem:[%s586 + $0x58] sm:$0xff] %v574
    %599 = vst [vmem:[%s586 + $0x60] sm:$0xff] %v577
    %600 = vst [vmem:[%s586 + $0x68] sm:$0xff] %v579
    %601 = vst [vmem:[%s586 + $0x70] sm:$0xff] %v582
    %602 = vst [vmem:[%s586 + $0x78] sm:$0xff] %v584
    %v603 = vadd.f32 %v547, %v549
    %v604 = vadd.f32 %v603, %v552
    %v605 = vadd.f32 %v604, %v554
    %v606 = vadd.f32 %v605, %v557
    %v607 = vadd.f32 %v606, %v559
    %v608 = vadd.f32 %v607, %v562
    %v609 = vadd.f32 %v608, %v564
    %v610 = vadd.f32 %v609, %v567
    %v611 = vadd.f32 %v610, %v569
    %v612 = vadd.f32 %v611, %v572
    %v613 = vadd.f32 %v612, %v574
    %v614 = vadd.f32 %v613, %v577
    %v615 = vadd.f32 %v614, %v579
    %v616 = vadd.f32 %v615, %v582
    %v617 = vadd.f32 %v616, %v584
    %v618 = vrot.slane %v617, 4
    %v619 = vadd.f32 %v617, %v618
    %v620 = vrot.slane %v619, 2
    %v621 = vadd.f32 %v619, %v620
    %v622 = vrot.slane %v621, 1
    %v623 = vadd.f32 %v621, %v622
    %v624 = vadd.f32 %v417, %v623
    %v625 = vmul.f32 %v547, %v547
    %v626 = vmul.f32 %v549, %v549
    %v627 = vmul.f32 %v552, %v552
    %v628 = vmul.f32 %v554, %v554
    %v629 = vmul.f32 %v557, %v557
    %v630 = vmul.f32 %v559, %v559
    %v631 = vmul.f32 %v562, %v562
    %v632 = vmul.f32 %v564, %v564
    %v633 = vmul.f32 %v567, %v567
    %v634 = vmul.f32 %v569, %v569
    %v635 = vmul.f32 %v572, %v572
    %v636 = vmul.f32 %v574, %v574
    %v637 = vmul.f32 %v577, %v577
    %v638 = vmul.f32 %v579, %v579
    %v639 = vmul.f32 %v582, %v582
    %v640 = vmul.f32 %v584, %v584
    %v641 = vadd.f32 %v625, %v626
    %v642 = vadd.f32 %v641, %v627
    %v643 = vadd.f32 %v642, %v628
    %v644 = vadd.f32 %v643, %v629
    %v645 = vadd.f32 %v644, %v630
    %v646 = vadd.f32 %v645, %v631
    %v647 = vadd.f32 %v646, %v632
    %v648 = vadd.f32 %v647, %v633
    %v649 = vadd.f32 %v648, %v634
    %v650 = vadd.f32 %v649, %v635
    %v651 = vadd.f32 %v650, %v636
    %v652 = vadd.f32 %v651, %v637
    %v653 = vadd.f32 %v652, %v638
    %v654 = vadd.f32 %v653, %v639
    %v655 = vadd.f32 %v654, %v640
    %v656 = vrot.slane %v655, 4
    %v657 = vadd.f32 %v655, %v656
    %v658 = vrot.slane %v657, 2
    %v659 = vadd.f32 %v657, %v658
    %v660 = vrot.slane %v659, 1
    %v661 = vadd.f32 %v659, %v660
    %v662 = vadd.f32 %v455, %v661
    %s663 = scalar_lea.vmem %s0, 192
    %v664 = vld [vmem:[%s663] sm:$0xf]
    %v665 = vld [vmem:[%s663 + $0x4] sm:$0xf]
    %v666 = vld [vmem:[%s663 + $0x8] sm:$0xf]
    %v667 = vld [vmem:[%s663 + $0xc] sm:$0xf]
    %v668 = vld [vmem:[%s663 + $0x10] sm:$0xf]
    %v669 = vld [vmem:[%s663 + $0x14] sm:$0xf]
    %v670 = vld [vmem:[%s663 + $0x18] sm:$0xf]
    %v671 = vld [vmem:[%s663 + $0x1c] sm:$0xf]
    %v672 = vld [vmem:[%s663 + $0x20] sm:$0xf]
    %v673 = vld [vmem:[%s663 + $0x24] sm:$0xf]
    %v674 = vld [vmem:[%s663 + $0x28] sm:$0xf]
    %v675 = vld [vmem:[%s663 + $0x2c] sm:$0xf]
    %v676 = vld [vmem:[%s663 + $0x30] sm:$0xf]
    %v677 = vld [vmem:[%s663 + $0x34] sm:$0xf]
    %v678 = vld [vmem:[%s663 + $0x38] sm:$0xf]
    %v679 = vld [vmem:[%s663 + $0x3c] sm:$0xf]
    %v696 = vunpack.c.l.b16 %v664
    %v697 = vunpack.c.l.b16 %v665
    %v698 = vunpack.c.l.b16 %v666
    %v699 = vunpack.c.l.b16 %v667
    %v700 = vunpack.c.l.b16 %v668
    %v701 = vunpack.c.l.b16 %v669
    %v702 = vunpack.c.l.b16 %v670
    %v703 = vunpack.c.l.b16 %v671
    %v704 = vunpack.c.l.b16 %v672
    %v705 = vunpack.c.l.b16 %v673
    %v706 = vunpack.c.l.b16 %v674
    %v707 = vunpack.c.l.b16 %v675
    %v708 = vunpack.c.l.b16 %v676
    %v709 = vunpack.c.l.b16 %v677
    %v710 = vunpack.c.l.b16 %v678
    %v711 = vunpack.c.l.b16 %v679
    %v712 = vpack.c.b16 %v697, %v696
    %v713 = vpack.c.b16 %v699, %v698
    %v714 = vpack.c.b16 %v701, %v700
    %v715 = vpack.c.b16 %v703, %v702
    %v716 = vpack.c.b16 %v705, %v704
    %v717 = vpack.c.b16 %v707, %v706
    %v718 = vpack.c.b16 %v709, %v708
    %v719 = vpack.c.b16 %v711, %v710
    %v721 = vsel %vm95, %v712, 0
    %v724 = vsel %vm95, %v713, 0
    %v727 = vsel %vm95, %v714, 0
    %v730 = vsel %vm95, %v715, 0
    %v733 = vsel %vm95, %v716, 0
    %v736 = vsel %vm95, %v717, 0
    %v739 = vsel %vm95, %v718, 0
    %v742 = vsel %vm95, %v719, 0
    %744 = vmatpush.bf16.msra.mxu0 0
    %745 = vmatpush.bf16.msra.mxu0 0
    %746 = vmatpush.bf16.msra.mxu0 0
    %747 = vmatpush.bf16.msra.mxu0 0
    %748 = vmatpush.bf16.msra.mxu0 0
    %749 = vmatpush.bf16.msra.mxu0 %v122
    %750 = vmatpush.bf16.msra.mxu0 %v91
    %751 = vmatpush.bf16.msra.mxu0 %v90
    %752 = vmatmul.bf16.gmra.mxu0 %v721
    %v753 = vpop.f32.mrf.mxu0
    %v754 = vadd.f32 0.0, %v753
    %v755 = vpop.f32.mrf.mxu0
    %v756 = vadd.f32 0.0, %v755
    %757 = vmatmul.bf16.gmra.mxu0 %v724
    %v758 = vpop.f32.mrf.mxu0
    %v759 = vadd.f32 0.0, %v758
    %v760 = vpop.f32.mrf.mxu0
    %v761 = vadd.f32 0.0, %v760
    %762 = vmatmul.bf16.gmra.mxu0 %v727
    %v763 = vpop.f32.mrf.mxu0
    %v764 = vadd.f32 0.0, %v763
    %v765 = vpop.f32.mrf.mxu0
    %v766 = vadd.f32 0.0, %v765
    %767 = vmatmul.bf16.gmra.mxu0 %v730
    %v768 = vpop.f32.mrf.mxu0
    %v769 = vadd.f32 0.0, %v768
    %v770 = vpop.f32.mrf.mxu0
    %v771 = vadd.f32 0.0, %v770
    %772 = vmatmul.bf16.gmra.mxu0 %v733
    %v773 = vpop.f32.mrf.mxu0
    %v774 = vadd.f32 0.0, %v773
    %v775 = vpop.f32.mrf.mxu0
    %v776 = vadd.f32 0.0, %v775
    %777 = vmatmul.bf16.gmra.mxu0 %v736
    %v778 = vpop.f32.mrf.mxu0
    %v779 = vadd.f32 0.0, %v778
    %v780 = vpop.f32.mrf.mxu0
    %v781 = vadd.f32 0.0, %v780
    %782 = vmatmul.bf16.gmra.mxu0 %v739
    %v783 = vpop.f32.mrf.mxu0
    %v784 = vadd.f32 0.0, %v783
    %v785 = vpop.f32.mrf.mxu0
    %v786 = vadd.f32 0.0, %v785
    %787 = vmatmul.bf16.gmra.mxu0 %v742
    %v788 = vpop.f32.mrf.mxu0
    %v789 = vadd.f32 0.0, %v788
    %v790 = vpop.f32.mrf.mxu0
    %v791 = vadd.f32 0.0, %v790
    %792 = vdwg.mxu0
    %s793 = scalar_lea.vmem [#allocation2], 384
    %794 = vst [vmem:[%s793] sm:$0xff] %v754
    %795 = vst [vmem:[%s793 + $0x8] sm:$0xff] %v756
    %796 = vst [vmem:[%s793 + $0x10] sm:$0xff] %v759
    %797 = vst [vmem:[%s793 + $0x18] sm:$0xff] %v761
    %798 = vst [vmem:[%s793 + $0x20] sm:$0xff] %v764
    %799 = vst [vmem:[%s793 + $0x28] sm:$0xff] %v766
    %800 = vst [vmem:[%s793 + $0x30] sm:$0xff] %v769
    %801 = vst [vmem:[%s793 + $0x38] sm:$0xff] %v771
    %802 = vst [vmem:[%s793 + $0x40] sm:$0xff] %v774
    %803 = vst [vmem:[%s793 + $0x48] sm:$0xff] %v776
    %804 = vst [vmem:[%s793 + $0x50] sm:$0xff] %v779
    %805 = vst [vmem:[%s793 + $0x58] sm:$0xff] %v781
    %806 = vst [vmem:[%s793 + $0x60] sm:$0xff] %v784
    %807 = vst [vmem:[%s793 + $0x68] sm:$0xff] %v786
    %808 = vst [vmem:[%s793 + $0x70] sm:$0xff] %v789
    %809 = vst [vmem:[%s793 + $0x78] sm:$0xff] %v791
    %v810 = vadd.f32 %v754, %v756
    %v811 = vadd.f32 %v810, %v759
    %v812 = vadd.f32 %v811, %v761
    %v813 = vadd.f32 %v812, %v764
    %v814 = vadd.f32 %v813, %v766
    %v815 = vadd.f32 %v814, %v769
    %v816 = vadd.f32 %v815, %v771
    %v817 = vadd.f32 %v816, %v774
    %v818 = vadd.f32 %v817, %v776
    %v819 = vadd.f32 %v818, %v779
    %v820 = vadd.f32 %v819, %v781
    %v821 = vadd.f32 %v820, %v784
    %v822 = vadd.f32 %v821, %v786
    %v823 = vadd.f32 %v822, %v789
    %v824 = vadd.f32 %v823, %v791
    %v825 = vrot.slane %v824, 4
    %v826 = vadd.f32 %v824, %v825
    %v827 = vrot.slane %v826, 2
    %v828 = vadd.f32 %v826, %v827
    %v829 = vrot.slane %v828, 1
    %v830 = vadd.f32 %v828, %v829
    %v831 = vadd.f32 %v624, %v830
    %v832 = vmul.f32 %v754, %v754
    %v833 = vmul.f32 %v756, %v756
    %v834 = vmul.f32 %v759, %v759
    %v835 = vmul.f32 %v761, %v761
    %v836 = vmul.f32 %v764, %v764
    %v837 = vmul.f32 %v766, %v766
    %v838 = vmul.f32 %v769, %v769
    %v839 = vmul.f32 %v771, %v771
    %v840 = vmul.f32 %v774, %v774
    %v841 = vmul.f32 %v776, %v776
    %v842 = vmul.f32 %v779, %v779
    %v843 = vmul.f32 %v781, %v781
    %v844 = vmul.f32 %v784, %v784
    %v845 = vmul.f32 %v786, %v786
    %v846 = vmul.f32 %v789, %v789
    %v847 = vmul.f32 %v791, %v791
    %v848 = vadd.f32 %v832, %v833
    %v849 = vadd.f32 %v848, %v834
    %v850 = vadd.f32 %v849, %v835
    %v851 = vadd.f32 %v850, %v836
    %v852 = vadd.f32 %v851, %v837
    %v853 = vadd.f32 %v852, %v838
    %v854 = vadd.f32 %v853, %v839
    %v855 = vadd.f32 %v854, %v840
    %v856 = vadd.f32 %v855, %v841
    %v857 = vadd.f32 %v856, %v842
    %v858 = vadd.f32 %v857, %v843
    %v859 = vadd.f32 %v858, %v844
    %v860 = vadd.f32 %v859, %v845
    %v861 = vadd.f32 %v860, %v846
    %v862 = vadd.f32 %v861, %v847
    %v863 = vrot.slane %v862, 4
    %v864 = vadd.f32 %v862, %v863
    %v865 = vrot.slane %v864, 2
    %v866 = vadd.f32 %v864, %v865
    %v867 = vrot.slane %v866, 1
    %v868 = vadd.f32 %v866, %v867
    %v869 = vadd.f32 %v662, %v868
    %v870 = vmul.f32 %v831, 0.001953125
    %v871 = vmul.f32 %v869, 0.001953125
    %v872 = vmul.f32 %v870, %v870
    %v873 = vsub.f32 %v871, %v872
    %v874 = vmax.f32 %v873, 0.0
    %v875 = vld [vmem:[%s2] sm:$0x1]
    %v876 = vadd.f32 %v874, 1e-05
    %v877 = vrsqrt.pop %v876
    %v878 = vmul.f32 %v877, %v876
    %v879 = vmul.f32 %v878, %v877
    %v880 = vmul.f32 0.5, %v879
    %v881 = vsub.f32 1.5, %v880
    %v882 = vmul.f32 %v877, %v881
    %vm883 = vweird.f32 %v876
    %vm884 = vweird.f32 %v877
    %vm885 = vmor %vm883, %vm884
    %v886 = vsel %vm885, %v877, %v882
    %v887 = vmul.f32 %v875, %v886
    %v888 = vld [vmem:[%s3] sm:$0x1]
    %v889 = vmul.f32 %v870, %v887
    %v890 = vsub.f32 %v888, %v889
    %v891 = vld [vmem:[#allocation2] sm:$0xff]
    %v892 = vld [vmem:[#allocation2 + $0x8] sm:$0xff]
    %v893 = vld [vmem:[#allocation2 + $0x10] sm:$0xff]
    %v894 = vld [vmem:[#allocation2 + $0x18] sm:$0xff]
    %v895 = vld [vmem:[#allocation2 + $0x20] sm:$0xff]
    %v896 = vld [vmem:[#allocation2 + $0x28] sm:$0xff]
    %v897 = vld [vmem:[#allocation2 + $0x30] sm:$0xff]
    %v898 = vld [vmem:[#allocation2 + $0x38] sm:$0xff]
    %v899 = vld [vmem:[#allocation2 + $0x40] sm:$0xff]
    %v900 = vld [vmem:[#allocation2 + $0x48] sm:$0xff]
    %v901 = vld [vmem:[#allocation2 + $0x50] sm:$0xff]
    %v902 = vld [vmem:[#allocation2 + $0x58] sm:$0xff]
    %v903 = vld [vmem:[#allocation2 + $0x60] sm:$0xff]
    %v904 = vld [vmem:[#allocation2 + $0x68] sm:$0xff]
    %v905 = vld [vmem:[#allocation2 + $0x70] sm:$0xff]
    %v906 = vld [vmem:[#allocation2 + $0x78] sm:$0xff]
    %v908 = vperm.slane %v887, 0
    %v910 = vmul.f32 %v891, %v908
    %v911 = vmul.f32 %v892, %v908
    %v912 = vmul.f32 %v893, %v908
    %v913 = vmul.f32 %v894, %v908
    %v914 = vmul.f32 %v895, %v908
    %v915 = vmul.f32 %v896, %v908
    %v916 = vmul.f32 %v897, %v908
    %v917 = vmul.f32 %v898, %v908
    %v918 = vmul.f32 %v899, %v908
    %v919 = vmul.f32 %v900, %v908
    %v920 = vmul.f32 %v901, %v908
    %v921 = vmul.f32 %v902, %v908
    %v922 = vmul.f32 %v903, %v908
    %v923 = vmul.f32 %v904, %v908
    %v924 = vmul.f32 %v905, %v908
    %v925 = vmul.f32 %v906, %v908
    %v927 = vperm.slane %v890, 0
    %v929 = vadd.f32 %v910, %v927
    %v930 = vadd.f32 %v911, %v927
    %v931 = vadd.f32 %v912, %v927
    %v932 = vadd.f32 %v913, %v927
    %v933 = vadd.f32 %v914, %v927
    %v934 = vadd.f32 %v915, %v927
    %v935 = vadd.f32 %v916, %v927
    %v936 = vadd.f32 %v917, %v927
    %v937 = vadd.f32 %v918, %v927
    %v938 = vadd.f32 %v919, %v927
    %v939 = vadd.f32 %v920, %v927
    %v940 = vadd.f32 %v921, %v927
    %v941 = vadd.f32 %v922, %v927
    %v942 = vadd.f32 %v923, %v927
    %v943 = vadd.f32 %v924, %v927
    %v944 = vadd.f32 %v925, %v927
    %v945 = vmax.f32 %v929, 0.0
    %v946 = vmax.f32 %v930, 0.0
    %v947 = vmax.f32 %v931, 0.0
    %v948 = vmax.f32 %v932, 0.0
    %v949 = vmax.f32 %v933, 0.0
    %v950 = vmax.f32 %v934, 0.0
    %v951 = vmax.f32 %v935, 0.0
    %v952 = vmax.f32 %v936, 0.0
    %v953 = vmax.f32 %v937, 0.0
    %v954 = vmax.f32 %v938, 0.0
    %v955 = vmax.f32 %v939, 0.0
    %v956 = vmax.f32 %v940, 0.0
    %v957 = vmax.f32 %v941, 0.0
    %v958 = vmax.f32 %v942, 0.0
    %v959 = vmax.f32 %v943, 0.0
    %v960 = vmax.f32 %v944, 0.0
    %961 = vst [vmem:[#allocation2] sm:$0xff] %v945
    %962 = vst [vmem:[#allocation2 + $0x8] sm:$0xff] %v946
    %963 = vst [vmem:[#allocation2 + $0x10] sm:$0xff] %v947
    %964 = vst [vmem:[#allocation2 + $0x18] sm:$0xff] %v948
    %965 = vst [vmem:[#allocation2 + $0x20] sm:$0xff] %v949
    %966 = vst [vmem:[#allocation2 + $0x28] sm:$0xff] %v950
    %967 = vst [vmem:[#allocation2 + $0x30] sm:$0xff] %v951
    %968 = vst [vmem:[#allocation2 + $0x38] sm:$0xff] %v952
    %969 = vst [vmem:[#allocation2 + $0x40] sm:$0xff] %v953
    %970 = vst [vmem:[#allocation2 + $0x48] sm:$0xff] %v954
    %971 = vst [vmem:[#allocation2 + $0x50] sm:$0xff] %v955
    %972 = vst [vmem:[#allocation2 + $0x58] sm:$0xff] %v956
    %973 = vst [vmem:[#allocation2 + $0x60] sm:$0xff] %v957
    %974 = vst [vmem:[#allocation2 + $0x68] sm:$0xff] %v958
    %975 = vst [vmem:[#allocation2 + $0x70] sm:$0xff] %v959
    %976 = vst [vmem:[#allocation2 + $0x78] sm:$0xff] %v960
    %v977 = vld [vmem:[%s379] sm:$0xff]
    %v978 = vld [vmem:[%s379 + $0x8] sm:$0xff]
    %v979 = vld [vmem:[%s379 + $0x10] sm:$0xff]
    %v980 = vld [vmem:[%s379 + $0x18] sm:$0xff]
    %v981 = vld [vmem:[%s379 + $0x20] sm:$0xff]
    %v982 = vld [vmem:[%s379 + $0x28] sm:$0xff]
    %v983 = vld [vmem:[%s379 + $0x30] sm:$0xff]
    %v984 = vld [vmem:[%s379 + $0x38] sm:$0xff]
    %v985 = vld [vmem:[%s379 + $0x40] sm:$0xff]
    %v986 = vld [vmem:[%s379 + $0x48] sm:$0xff]
    %v987 = vld [vmem:[%s379 + $0x50] sm:$0xff]
    %v988 = vld [vmem:[%s379 + $0x58] sm:$0xff]
    %v989 = vld [vmem:[%s379 + $0x60] sm:$0xff]
    %v990 = vld [vmem:[%s379 + $0x68] sm:$0xff]
    %v991 = vld [vmem:[%s379 + $0x70] sm:$0xff]
    %v992 = vld [vmem:[%s379 + $0x78] sm:$0xff]
    %v993 = vmul.f32 %v977, %v908
    %v994 = vmul.f32 %v978, %v908
    %v995 = vmul.f32 %v979, %v908
    %v996 = vmul.f32 %v980, %v908
    %v997 = vmul.f32 %v981, %v908
    %v998 = vmul.f32 %v982, %v908
    %v999 = vmul.f32 %v983, %v908
    %v1000 = vmul.f32 %v984, %v908
    %v1001 = vmul.f32 %v985, %v908
    %v1002 = vmul.f32 %v986, %v908
    %v1003 = vmul.f32 %v987, %v908
    %v1004 = vmul.f32 %v988, %v908
    %v1005 = vmul.f32 %v989, %v908
    %v1006 = vmul.f32 %v990, %v908
    %v1007 = vmul.f32 %v991, %v908
    %v1008 = vmul.f32 %v992, %v908
    %v1009 = vadd.f32 %v993, %v927
    %v1010 = vadd.f32 %v994, %v927
    %v1011 = vadd.f32 %v995, %v927
    %v1012 = vadd.f32 %v996, %v927
    %v1013 = vadd.f32 %v997, %v927
    %v1014 = vadd.f32 %v998, %v927
    %v1015 = vadd.f32 %v999, %v927
    %v1016 = vadd.f32 %v1000, %v927
    %v1017 = vadd.f32 %v1001, %v927
    %v1018 = vadd.f32 %v1002, %v927
    %v1019 = vadd.f32 %v1003, %v927
    %v1020 = vadd.f32 %v1004, %v927
    %v1021 = vadd.f32 %v1005, %v927
    %v1022 = vadd.f32 %v1006, %v927
    %v1023 = vadd.f32 %v1007, %v927
    %v1024 = vadd.f32 %v1008, %v927
    %v1025 = vmax.f32 %v1009, 0.0
    %v1026 = vmax.f32 %v1010, 0.0
    %v1027 = vmax.f32 %v1011, 0.0
    %v1028 = vmax.f32 %v1012, 0.0
    %v1029 = vmax.f32 %v1013, 0.0
    %v1030 = vmax.f32 %v1014, 0.0
    %v1031 = vmax.f32 %v1015, 0.0
    %v1032 = vmax.f32 %v1016, 0.0
    %v1033 = vmax.f32 %v1017, 0.0
    %v1034 = vmax.f32 %v1018, 0.0
    %v1035 = vmax.f32 %v1019, 0.0
    %v1036 = vmax.f32 %v1020, 0.0
    %v1037 = vmax.f32 %v1021, 0.0
    %v1038 = vmax.f32 %v1022, 0.0
    %v1039 = vmax.f32 %v1023, 0.0
    %v1040 = vmax.f32 %v1024, 0.0
    %1041 = vst [vmem:[%s379] sm:$0xff] %v1025
    %1042 = vst [vmem:[%s379 + $0x8] sm:$0xff] %v1026
    %1043 = vst [vmem:[%s379 + $0x10] sm:$0xff] %v1027
    %1044 = vst [vmem:[%s379 + $0x18] sm:$0xff] %v1028
    %1045 = vst [vmem:[%s379 + $0x20] sm:$0xff] %v1029
    %1046 = vst [vmem:[%s379 + $0x28] sm:$0xff] %v1030
    %1047 = vst [vmem:[%s379 + $0x30] sm:$0xff] %v1031
    %1048 = vst [vmem:[%s379 + $0x38] sm:$0xff] %v1032
    %1049 = vst [vmem:[%s379 + $0x40] sm:$0xff] %v1033
    %1050 = vst [vmem:[%s379 + $0x48] sm:$0xff] %v1034
    %1051 = vst [vmem:[%s379 + $0x50] sm:$0xff] %v1035
    %1052 = vst [vmem:[%s379 + $0x58] sm:$0xff] %v1036
    %1053 = vst [vmem:[%s379 + $0x60] sm:$0xff] %v1037
    %1054 = vst [vmem:[%s379 + $0x68] sm:$0xff] %v1038
    %1055 = vst [vmem:[%s379 + $0x70] sm:$0xff] %v1039
    %1056 = vst [vmem:[%s379 + $0x78] sm:$0xff] %v1040
    %v1057 = vld [vmem:[%s586] sm:$0xff]
    %v1058 = vld [vmem:[%s586 + $0x8] sm:$0xff]
    %v1059 = vld [vmem:[%s586 + $0x10] sm:$0xff]
    %v1060 = vld [vmem:[%s586 + $0x18] sm:$0xff]
    %v1061 = vld [vmem:[%s586 + $0x20] sm:$0xff]
    %v1062 = vld [vmem:[%s586 + $0x28] sm:$0xff]
    %v1063 = vld [vmem:[%s586 + $0x30] sm:$0xff]
    %v1064 = vld [vmem:[%s586 + $0x38] sm:$0xff]
    %v1065 = vld [vmem:[%s586 + $0x40] sm:$0xff]
    %v1066 = vld [vmem:[%s586 + $0x48] sm:$0xff]
    %v1067 = vld [vmem:[%s586 + $0x50] sm:$0xff]
    %v1068 = vld [vmem:[%s586 + $0x58] sm:$0xff]
    %v1069 = vld [vmem:[%s586 + $0x60] sm:$0xff]
    %v1070 = vld [vmem:[%s586 + $0x68] sm:$0xff]
    %v1071 = vld [vmem:[%s586 + $0x70] sm:$0xff]
    %v1072 = vld [vmem:[%s586 + $0x78] sm:$0xff]
    %v1073 = vmul.f32 %v1057, %v908
    %v1074 = vmul.f32 %v1058, %v908
    %v1075 = vmul.f32 %v1059, %v908
    %v1076 = vmul.f32 %v1060, %v908
    %v1077 = vmul.f32 %v1061, %v908
    %v1078 = vmul.f32 %v1062, %v908
    %v1079 = vmul.f32 %v1063, %v908
    %v1080 = vmul.f32 %v1064, %v908
    %v1081 = vmul.f32 %v1065, %v908
    %v1082 = vmul.f32 %v1066, %v908
    %v1083 = vmul.f32 %v1067, %v908
    %v1084 = vmul.f32 %v1068, %v908
    %v1085 = vmul.f32 %v1069, %v908
    %v1086 = vmul.f32 %v1070, %v908
    %v1087 = vmul.f32 %v1071, %v908
    %v1088 = vmul.f32 %v1072, %v908
    %v1089 = vadd.f32 %v1073, %v927
    %v1090 = vadd.f32 %v1074, %v927
    %v1091 = vadd.f32 %v1075, %v927
    %v1092 = vadd.f32 %v1076, %v927
    %v1093 = vadd.f32 %v1077, %v927
    %v1094 = vadd.f32 %v1078, %v927
    %v1095 = vadd.f32 %v1079, %v927
    %v1096 = vadd.f32 %v1080, %v927
    %v1097 = vadd.f32 %v1081, %v927
    %v1098 = vadd.f32 %v1082, %v927
    %v1099 = vadd.f32 %v1083, %v927
    %v1100 = vadd.f32 %v1084, %v927
    %v1101 = vadd.f32 %v1085, %v927
    %v1102 = vadd.f32 %v1086, %v927
    %v1103 = vadd.f32 %v1087, %v927
    %v1104 = vadd.f32 %v1088, %v927
    %v1105 = vmax.f32 %v1089, 0.0
    %v1106 = vmax.f32 %v1090, 0.0
    %v1107 = vmax.f32 %v1091, 0.0
    %v1108 = vmax.f32 %v1092, 0.0
    %v1109 = vmax.f32 %v1093, 0.0
    %v1110 = vmax.f32 %v1094, 0.0
    %v1111 = vmax.f32 %v1095, 0.0
    %v1112 = vmax.f32 %v1096, 0.0
    %v1113 = vmax.f32 %v1097, 0.0
    %v1114 = vmax.f32 %v1098, 0.0
    %v1115 = vmax.f32 %v1099, 0.0
    %v1116 = vmax.f32 %v1100, 0.0
    %v1117 = vmax.f32 %v1101, 0.0
    %v1118 = vmax.f32 %v1102, 0.0
    %v1119 = vmax.f32 %v1103, 0.0
    %v1120 = vmax.f32 %v1104, 0.0
    %1121 = vst [vmem:[%s586] sm:$0xff] %v1105
    %1122 = vst [vmem:[%s586 + $0x8] sm:$0xff] %v1106
    %1123 = vst [vmem:[%s586 + $0x10] sm:$0xff] %v1107
    %1124 = vst [vmem:[%s586 + $0x18] sm:$0xff] %v1108
    %1125 = vst [vmem:[%s586 + $0x20] sm:$0xff] %v1109
    %1126 = vst [vmem:[%s586 + $0x28] sm:$0xff] %v1110
    %1127 = vst [vmem:[%s586 + $0x30] sm:$0xff] %v1111
    %1128 = vst [vmem:[%s586 + $0x38] sm:$0xff] %v1112
    %1129 = vst [vmem:[%s586 + $0x40] sm:$0xff] %v1113
    %1130 = vst [vmem:[%s586 + $0x48] sm:$0xff] %v1114
    %1131 = vst [vmem:[%s586 + $0x50] sm:$0xff] %v1115
    %1132 = vst [vmem:[%s586 + $0x58] sm:$0xff] %v1116
    %1133 = vst [vmem:[%s586 + $0x60] sm:$0xff] %v1117
    %1134 = vst [vmem:[%s586 + $0x68] sm:$0xff] %v1118
    %1135 = vst [vmem:[%s586 + $0x70] sm:$0xff] %v1119
    %1136 = vst [vmem:[%s586 + $0x78] sm:$0xff] %v1120
    %v1137 = vld [vmem:[%s793] sm:$0xff]
    %v1138 = vld [vmem:[%s793 + $0x8] sm:$0xff]
    %v1139 = vld [vmem:[%s793 + $0x10] sm:$0xff]
    %v1140 = vld [vmem:[%s793 + $0x18] sm:$0xff]
    %v1141 = vld [vmem:[%s793 + $0x20] sm:$0xff]
    %v1142 = vld [vmem:[%s793 + $0x28] sm:$0xff]
    %v1143 = vld [vmem:[%s793 + $0x30] sm:$0xff]
    %v1144 = vld [vmem:[%s793 + $0x38] sm:$0xff]
    %v1145 = vld [vmem:[%s793 + $0x40] sm:$0xff]
    %v1146 = vld [vmem:[%s793 + $0x48] sm:$0xff]
    %v1147 = vld [vmem:[%s793 + $0x50] sm:$0xff]
    %v1148 = vld [vmem:[%s793 + $0x58] sm:$0xff]
    %v1149 = vld [vmem:[%s793 + $0x60] sm:$0xff]
    %v1150 = vld [vmem:[%s793 + $0x68] sm:$0xff]
    %v1151 = vld [vmem:[%s793 + $0x70] sm:$0xff]
    %v1152 = vld [vmem:[%s793 + $0x78] sm:$0xff]
    %v1153 = vmul.f32 %v1137, %v908
    %v1154 = vmul.f32 %v1138, %v908
    %v1155 = vmul.f32 %v1139, %v908
    %v1156 = vmul.f32 %v1140, %v908
    %v1157 = vmul.f32 %v1141, %v908
    %v1158 = vmul.f32 %v1142, %v908
    %v1159 = vmul.f32 %v1143, %v908
    %v1160 = vmul.f32 %v1144, %v908
    %v1161 = vmul.f32 %v1145, %v908
    %v1162 = vmul.f32 %v1146, %v908
    %v1163 = vmul.f32 %v1147, %v908
    %v1164 = vmul.f32 %v1148, %v908
    %v1165 = vmul.f32 %v1149, %v908
    %v1166 = vmul.f32 %v1150, %v908
    %v1167 = vmul.f32 %v1151, %v908
    %v1168 = vmul.f32 %v1152, %v908
    %v1169 = vadd.f32 %v1153, %v927
    %v1170 = vadd.f32 %v1154, %v927
    %v1171 = vadd.f32 %v1155, %v927
    %v1172 = vadd.f32 %v1156, %v927
    %v1173 = vadd.f32 %v1157, %v927
    %v1174 = vadd.f32 %v1158, %v927
    %v1175 = vadd.f32 %v1159, %v927
    %v1176 = vadd.f32 %v1160, %v927
    %v1177 = vadd.f32 %v1161, %v927
    %v1178 = vadd.f32 %v1162, %v927
    %v1179 = vadd.f32 %v1163, %v927
    %v1180 = vadd.f32 %v1164, %v927
    %v1181 = vadd.f32 %v1165, %v927
    %v1182 = vadd.f32 %v1166, %v927
    %v1183 = vadd.f32 %v1167, %v927
    %v1184 = vadd.f32 %v1168, %v927
    %v1185 = vmax.f32 %v1169, 0.0
    %v1186 = vmax.f32 %v1170, 0.0
    %v1187 = vmax.f32 %v1171, 0.0
    %v1188 = vmax.f32 %v1172, 0.0
    %v1189 = vmax.f32 %v1173, 0.0
    %v1190 = vmax.f32 %v1174, 0.0
    %v1191 = vmax.f32 %v1175, 0.0
    %v1192 = vmax.f32 %v1176, 0.0
    %v1193 = vmax.f32 %v1177, 0.0
    %v1194 = vmax.f32 %v1178, 0.0
    %v1195 = vmax.f32 %v1179, 0.0
    %v1196 = vmax.f32 %v1180, 0.0
    %v1197 = vmax.f32 %v1181, 0.0
    %v1198 = vmax.f32 %v1182, 0.0
    %v1199 = vmax.f32 %v1183, 0.0
    %v1200 = vmax.f32 %v1184, 0.0
    %1201 = vst [vmem:[%s793] sm:$0xff] %v1185
    %1202 = vst [vmem:[%s793 + $0x8] sm:$0xff] %v1186
    %1203 = vst [vmem:[%s793 + $0x10] sm:$0xff] %v1187
    %1204 = vst [vmem:[%s793 + $0x18] sm:$0xff] %v1188
    %1205 = vst [vmem:[%s793 + $0x20] sm:$0xff] %v1189
    %1206 = vst [vmem:[%s793 + $0x28] sm:$0xff] %v1190
    %1207 = vst [vmem:[%s793 + $0x30] sm:$0xff] %v1191
    %1208 = vst [vmem:[%s793 + $0x38] sm:$0xff] %v1192
    %1209 = vst [vmem:[%s793 + $0x40] sm:$0xff] %v1193
    %1210 = vst [vmem:[%s793 + $0x48] sm:$0xff] %v1194
    %1211 = vst [vmem:[%s793 + $0x50] sm:$0xff] %v1195
    %1212 = vst [vmem:[%s793 + $0x58] sm:$0xff] %v1196
    %1213 = vst [vmem:[%s793 + $0x60] sm:$0xff] %v1197
    %1214 = vst [vmem:[%s793 + $0x68] sm:$0xff] %v1198
    %1215 = vst [vmem:[%s793 + $0x70] sm:$0xff] %v1199
    %1216 = vst [vmem:[%s793 + $0x78] sm:$0xff] %v1200
    // Predicated region
    $region18: #{tpu_custom_call.1} parent=1 // pred_check
      _
    $region19: #{tpu_custom_call.1} parent=1 // pred_check_branch
      %1218 = sbr.rel (0) target = $region21
    $region20: #{tpu_custom_call.1} parent=1 // pred_region
      %1220 = vsyncadd [#allocation3], 0
      %s1221 = sshll.u32 [#allocation2], 4
      %s1222 = int_to_ptr.vmem [resolvable:$true] %s1221
      %s1223 = sshll.u32 %s4, 4
      %s1224 = int_to_ptr.hbm [resolvable:$true] %s1223
      %1229 = dma.vmem_to_hbm [thread:$0]  %s1222, 8192, %s1224, [#allocation3], 128, 128, 8
    $region21: #{tpu_custom_call.1} parent=1 // pred_fallthru
      _
    // Predicated region
    $region22: #{tpu_custom_call.1} parent=1 // pred_check
      _
    $region23: #{tpu_custom_call.1} parent=1 // pred_check_branch
      %1231 = sbr.rel (0) target = $region25
    $region24: #{tpu_custom_call.1} parent=1 // pred_region
      %1233 = dma.done [#allocation3], 8192
    $region25: #{tpu_custom_call.1} parent=1 // pred_fallthru
      _
    %1234 = vsyncpa [#allocation3], 1

</llo_original>
